<compile_context>
chip_gen: v7x
topology: tpu7x:2x2x1
jax: 0.10.0
libtpu: 0.0.40
codegen_flags: <defaults>
</compile_context>

<pallas_src>
import jax
import jax.numpy as jnp
from jax import lax
from jax.experimental import pallas as pl
from jax.experimental.pallas import tpu as pltpu


def _round_up(x, m):
    return ((x + m - 1) // m) * m


# ---------------------------------------------------------------------------
# Kernel 1 (two-kernel path): merged_weight tile = sum_l mask[l] * W_stack[l]
# ---------------------------------------------------------------------------
def _merge_weights_kernel(wmask_ref, w_stack_ref, o_ref):
    # wmask_ref: SMEM (L,) f32;  w_stack_ref: (L, TN, TK);  o_ref: (TN, TK)
    num_linears = w_stack_ref.shape[0]
    acc = wmask_ref[0] * w_stack_ref[0].astype(jnp.float32)
    for l in range(1, num_linears):          # left-to-right, like Python sum()
        acc = acc + wmask_ref[l] * w_stack_ref[l].astype(jnp.float32)
    o_ref[...] = acc.astype(o_ref.dtype)


def _merge_bias_tile(bmask_ref, b_stack_ref):
    # bmask_ref: SMEM (L,);  b_stack_ref: (L, TN)  ->  (1, TN) f32
    num_linears = b_stack_ref.shape[0]
    bias = bmask_ref[0] * b_stack_ref[0:1, :].astype(jnp.float32)
    for l in range(1, num_linears):
        bias = bias + bmask_ref[l] * b_stack_ref[l:l + 1, :].astype(jnp.float32)
    return bias


# ---------------------------------------------------------------------------
# Kernel 2 (two-kernel path): y = x @ merged_w.T + merged_bias
# ---------------------------------------------------------------------------
def _masked_linear_kernel(bmask_ref, x_ref, w_ref, b_stack_ref, o_ref, acc_ref):
    # x_ref: (TM, TK);  w_ref: (TN, TK);  b_stack_ref: (L, TN)
    # o_ref: (TM, TN);  acc_ref: VMEM (TM, TN) f32
    k = pl.program_id(2)

    @pl.when(k == 0)
    def _init():
        acc_ref[...] = jnp.zeros_like(acc_ref)

    acc_ref[...] += lax.dot_general(
        x_ref[...], w_ref[...],
        dimension_numbers=(((1,), (1,)), ((), ())),   # contract K of both (x @ W^T)
        preferred_element_type=jnp.float32)

    @pl.when(k == pl.num_programs(2) - 1)
    def _finalize():
        o_ref[...] = (acc_ref[...] + _merge_bias_tile(bmask_ref, b_stack_ref)
                      ).astype(o_ref.dtype)


# ---------------------------------------------------------------------------
# Fused kernel (single M tile): merge the weight tile on the VPU and feed the
# MXU directly — the merged weight never round-trips through HBM.
# ---------------------------------------------------------------------------
def _fused_masked_linear_kernel(wmask_ref, bmask_ref, x_ref, w_stack_ref,
                                b_stack_ref, o_ref, acc_ref):
    # grid = (N tiles, K tiles);  x_ref: (TM, TK);  w_stack_ref: (L, TN, TK)
    k = pl.program_id(1)

    @pl.when(k == 0)
    def _init():
        acc_ref[...] = jnp.zeros_like(acc_ref)

    num_linears = w_stack_ref.shape[0]
    w = wmask_ref[0] * w_stack_ref[0].astype(jnp.float32)
    for l in range(1, num_linears):
        w = w + wmask_ref[l] * w_stack_ref[l].astype(jnp.float32)

    acc_ref[...] += lax.dot_general(
        x_ref[...], w.astype(x_ref.dtype),
        dimension_numbers=(((1,), (1,)), ((), ())),
        preferred_element_type=jnp.float32)

    @pl.when(k == pl.num_programs(1) - 1)
    def _finalize():
        o_ref[...] = (acc_ref[...] + _merge_bias_tile(bmask_ref, b_stack_ref)
                      ).astype(o_ref.dtype)


# ---------------------------------------------------------------------------
# Wrapper
# ---------------------------------------------------------------------------
def linears_with_masks(x, weights, biases, weight_values, bias_values=None,
                       *, tm=256, tn=256, tk=512):
    """x: (..., in_features); weights: list of (out, in); biases: list of (out,) or None."""
    num_linears = len(weights)
    out_f, in_f = weights[0].shape
    if bias_values is None:
        bias_values = [None] * num_linears

    orig_lead = x.shape[:-1]
    x2d = x.reshape(-1, in_f)
    rows = x2d.shape[0]
    dtype = x.dtype

    # Scalar masks (the Mask parameters; Mask default value = 1), stacked W / b.
    w_masks = jnp.array([1.0 if v is None else float(v) for v in weight_values],
                        dtype=jnp.float32)
    b_mask_vals, b_rows = [], []
    for b, bv in zip(biases, bias_values):
        if b is None:                                    # torch: missing bias -> zeros
            b_rows.append(jnp.zeros((out_f,), dtype=dtype))
            b_mask_vals.append(0.0)
        else:
            b_rows.append(jnp.asarray(b).astype(dtype))
            b_mask_vals.append(1.0 if bv is None else float(bv))
    b_masks = jnp.array(b_mask_vals, dtype=jnp.float32)
    w_stack = jnp.stack([jnp.asarray(w).astype(dtype) for w in weights])  # (L, O, I)
    b_stack = jnp.stack(b_rows)                                           # (L, O)

    # Tile sizes clamped to (padded) problem size; keep lane dims multiples of 128.
    TM = min(tm, _round_up(rows, 8))
    TN = min(tn, _round_up(out_f, 128))
    TK = min(tk, _round_up(in_f, 128))
    rows_p = _round_up(rows, TM)
    out_p = _round_up(out_f, TN)
    in_p = _round_up(in_f, TK)

    # Zero padding: padded K contributes 0 to the dot; padded rows/cols sliced off.
    x_p = jnp.pad(x2d, ((0, rows_p - rows), (0, in_p - in_f)))
    w_stack_p = jnp.pad(w_stack, ((0, 0), (0, out_p - out_f), (0, in_p - in_f)))
    b_stack_p = jnp.pad(b_stack, ((0, 0), (0, out_p - out_f)))

    itemsize = jnp.dtype(dtype).itemsize
    n_jt, n_kt = out_p // TN, in_p // TK

    if rows_p == TM:
        # --- Fused path: merge + matmul in one kernel (no merged-W HBM traffic) ---
        cost = pl.CostEstimate(
            flops=2 * rows_p * out_p * in_p + 2 * num_linears * out_p * in_p,
            transcendentals=0,
            bytes_accessed=itemsize * (n_jt * rows_p * in_p
                                       + num_linears * out_p * in_p
                                       + num_linears * out_p + rows_p * out_p))
        out_arr = pl.pallas_call(
            _fused_masked_linear_kernel,
            out_shape=jax.ShapeDtypeStruct((rows_p, out_p), dtype),
            grid=(n_jt, n_kt),
            in_specs=[
                pl.BlockSpec(memory_space=pltpu.MemorySpace.SMEM),          # weight masks
                pl.BlockSpec(memory_space=pltpu.MemorySpace.SMEM),          # bias masks
                pl.BlockSpec((TM, TK), lambda j, k: (0, k)),                # x
                pl.BlockSpec((num_linears, TN, TK), lambda j, k: (0, j, k)),  # stacked W
                pl.BlockSpec((num_linears, TN), lambda j, k: (0, j)),       # stacked bias
            ],
            out_specs=pl.BlockSpec((TM, TN), lambda j, k: (0, j)),
            scratch_shapes=[pltpu.VMEM((TM, TN), jnp.float32)],
            compiler_params=pltpu.CompilerParams(
                dimension_semantics=("parallel", "arbitrary")),
            cost_estimate=cost,
        )(w_masks, b_masks, x_p, w_stack_p, b_stack_p)
    else:
        # --- Kernel 1: merge the masked weights (element-wise, fully parallel) ---
        merged_w = pl.pallas_call(
            _merge_weights_kernel,
            out_shape=jax.ShapeDtypeStruct((out_p, in_p), dtype),
            grid=(n_jt, n_kt),
            in_specs=[
                pl.BlockSpec(memory_space=pltpu.MemorySpace.SMEM),            # weight masks
                pl.BlockSpec((num_linears, TN, TK), lambda j, k: (0, j, k)),  # stacked W
            ],
            out_specs=pl.BlockSpec((TN, TK), lambda j, k: (j, k)),
            compiler_params=pltpu.CompilerParams(
                dimension_semantics=("parallel", "parallel")),
        )(w_masks, w_stack_p)

        # --- Kernel 2: tiled matmul with merged-bias epilogue ---
        cost = pl.CostEstimate(
            flops=2 * rows_p * out_p * in_p,
            transcendentals=0,
            bytes_accessed=itemsize * (rows_p * in_p + out_p * in_p
                                       + num_linears * out_p + rows_p * out_p))
        out_arr = pl.pallas_call(
            _masked_linear_kernel,
            out_shape=jax.ShapeDtypeStruct((rows_p, out_p), dtype),
            grid=(rows_p // TM, n_jt, n_kt),
            in_specs=[
                pl.BlockSpec(memory_space=pltpu.MemorySpace.SMEM),            # bias masks
                pl.BlockSpec((TM, TK), lambda i, j, k: (i, k)),               # x
                pl.BlockSpec((TN, TK), lambda i, j, k: (j, k)),               # merged W
                pl.BlockSpec((num_linears, TN), lambda i, j, k: (0, j)),      # stacked bias
            ],
            out_specs=pl.BlockSpec((TM, TN), lambda i, j, k: (i, j)),
            scratch_shapes=[pltpu.VMEM((TM, TN), jnp.float32)],
            compiler_params=pltpu.CompilerParams(
                dimension_semantics=("parallel", "parallel", "arbitrary")),
            cost_estimate=cost,
        )(b_masks, x_p, merged_w, b_stack_p)

    return out_arr[:rows, :out_f].reshape(orig_lead + (out_f,))


# ---------------------------------------------------------------------------
# Pure-JAX reference (mirrors the PyTorch forward exactly)
# ---------------------------------------------------------------------------
def _reference(x, weights, biases, weight_values, bias_values):
    merged_w = None
    for w, wv in zip(weights, weight_values):
        m = 1.0 if wv is None else float(wv)
        t = jnp.float32(m) * w.astype(jnp.float32)
        merged_w = t if merged_w is None else merged_w + t
    out_f = weights[0].shape[0]
    merged_b = jnp.zeros((out_f,), jnp.float32)
    for b, bv in zip(biases, bias_values):
        if b is None:
            contrib = jnp.zeros((out_f,), jnp.float32)
        else:
            m = 1.0 if bv is None else float(bv)
            contrib = jnp.float32(m) * b.astype(jnp.float32)
        merged_b = merged_b + contrib
    y = jnp.einsum("...i,oi->...o", x.astype(jnp.float32), merged_w,
                   precision=lax.Precision.HIGHEST) + merged_b
    return y.astype(x.dtype)


if __name__ == "__main__":
    key = jax.random.PRNGKey(0)
    L, IN, OUT = 3, 32, 48
    keys = jax.random.split(key, 2 * L + 2)

    weights = [0.1 * jax.random.normal(keys[2 + i], (OUT, IN), dtype=jnp.float32)
               for i in range(L)]
    biases = [0.1 * jax.random.normal(keys[2 + L + i], (OUT,), dtype=jnp.float32)
              for i in range(L)]
    biases[2] = None                      # third linear has no bias (-> zeros in the sum)
    weight_values = [0.5, -1.25, 2.0]     # scalar weight masks
    bias_values = [1.5, None, 0.75]       # None -> Mask default value 1

    # Case 1: small batch (2, 8, IN) -> fused single-kernel path.
    x1 = jax.random.normal(keys[0], (2, 8, IN), dtype=jnp.float32)
    out1 = jax.block_until_ready(
        linears_with_masks(x1, weights, biases, weight_values, bias_values))
    ref1 = _reference(x1, weights, biases, weight_values, bias_values)
    assert out1.shape == (2, 8, OUT) and out1.dtype == x1.dtype
    assert jnp.allclose(out1, ref1, atol=1e-3, rtol=1e-3), "fused path mismatch"

    # Case 2: many rows (600, IN) -> two-kernel (merge + tiled matmul) path.
    x2 = jax.random.normal(keys[1], (600, IN), dtype=jnp.float32)
    out2 = jax.block_until_ready(
        linears_with_masks(x2, weights, biases, weight_values, bias_values))
    ref2 = _reference(x2, weights, biases, weight_values, bias_values)
    assert out2.shape == (600, OUT) and out2.dtype == x2.dtype
    assert jnp.allclose(out2, ref2, atol=1e-3, rtol=1e-3), "tiled path mismatch"

    print("KERNEL_OK")
</pallas_src>

<mosaic_0001>
module attributes {stable_mosaic.version = 11 : i64} {
  func.func @_fused_masked_linear_kernel(%arg0: i32, %arg1: i32, %arg2: memref<3xf32, #tpu.memory_space<smem>>, %arg3: memref<3xf32, #tpu.memory_space<smem>>, %arg4: memref<16x128xf32, #tpu.memory_space<vmem>>, %arg5: memref<3x128x128xf32, #tpu.memory_space<vmem>>, %arg6: memref<3x128xf32, #tpu.memory_space<vmem>>, %arg7: memref<16x128xf32, #tpu.memory_space<vmem>>, %arg8: memref<16x128xf32, #tpu.memory_space<vmem>>) attributes {dimension_semantics = [#tpu.dimension_semantics<parallel>, #tpu.dimension_semantics<arbitrary>], iteration_bounds = array<i64: 1, 1>, scalar_prefetch = 0 : i64, scratch_operands = 1 : i64, tpu.core_type = #tpu.core_type<tc>, window_params = [{transform_indices = @transform_0, window_bounds = array<i64: 3>}, {transform_indices = @transform_1, window_bounds = array<i64: 3>}, {transform_indices = @transform_2, window_bounds = array<i64: 16, 128>}, {transform_indices = @transform_3, window_bounds = array<i64: 3, 128, 128>}, {transform_indices = @transform_4, window_bounds = array<i64: 3, 128>}, {transform_indices = @transform_5, window_bounds = array<i64: 16, 128>}]} {
    %c0_i32 = arith.constant 0 : i32
    %0 = arith.cmpi eq, %arg1, %c0_i32 : i32
    %1 = arith.extui %0 : i1 to i32
    %c0_i32_0 = arith.constant 0 : i32
    %2 = arith.cmpi ne, %1, %c0_i32_0 : i32
    scf.if %2 {
      %cst_18 = arith.constant 0.000000e+00 : f32
      %28 = vector.broadcast %cst_18 : f32 to vector<16x128xf32>
      %c0_19 = arith.constant 0 : index
      %c0_20 = arith.constant 0 : index
      %29 = vector.load %arg8[%c0_19, %c0_20] : memref<16x128xf32, #tpu.memory_space<vmem>>, vector<16x128xf32>
      tpu.vector_store %arg8[%c0_19, %c0_20], %28 {strides = array<i32>} : memref<16x128xf32, #tpu.memory_space<vmem>>, vector<16x128xf32>,
    } else {
    }
    %c0 = arith.constant 0 : index
    %3 = memref.load %arg2[%c0] : memref<3xf32, #tpu.memory_space<smem>>
    %c0_1 = arith.constant 0 : index
    %c0_2 = arith.constant 0 : index
    %c0_3 = arith.constant 0 : index
    %4 = vector.load %arg5[%c0_1, %c0_2, %c0_3] : memref<3x128x128xf32, #tpu.memory_space<vmem>>, vector<1x128x128xf32>
    %5 = vector.shape_cast %4 : vector<1x128x128xf32> to vector<128x128xf32>
    %6 = vector.broadcast %3 : f32 to vector<128x128xf32>
    %7 = arith.mulf %6, %5 : vector<128x128xf32>
    %c1 = arith.constant 1 : index
    %8 = memref.load %arg2[%c1] : memref<3xf32, #tpu.memory_space<smem>>
    %c1_4 = arith.constant 1 : index
    %c0_5 = arith.constant 0 : index
    %c0_6 = arith.constant 0 : index
    %9 = vector.load %arg5[%c1_4, %c0_5, %c0_6] : memref<3x128x128xf32, #tpu.memory_space<vmem>>, vector<1x128x128xf32>
    %10 = vector.shape_cast %9 : vector<1x128x128xf32> to vector<128x128xf32>
    %11 = vector.broadcast %8 : f32 to vector<128x128xf32>
    %12 = arith.mulf %11, %10 : vector<128x128xf32>
    %13 = arith.addf %7, %12 : vector<128x128xf32>
    %c2 = arith.constant 2 : index
    %14 = memref.load %arg2[%c2] : memref<3xf32, #tpu.memory_space<smem>>
    %c2_7 = arith.constant 2 : index
    %c0_8 = arith.constant 0 : index
    %c0_9 = arith.constant 0 : index
    %15 = vector.load %arg5[%c2_7, %c0_8, %c0_9] : memref<3x128x128xf32, #tpu.memory_space<vmem>>, vector<1x128x128xf32>
    %16 = vector.shape_cast %15 : vector<1x128x128xf32> to vector<128x128xf32>
    %17 = vector.broadcast %14 : f32 to vector<128x128xf32>
    %18 = arith.mulf %17, %16 : vector<128x128xf32>
    %19 = arith.addf %13, %18 : vector<128x128xf32>
    %c0_10 = arith.constant 0 : index
    %c0_11 = arith.constant 0 : index
    %20 = vector.load %arg8[%c0_10, %c0_11] : memref<16x128xf32, #tpu.memory_space<vmem>>, vector<16x128xf32>
    %c0_12 = arith.constant 0 : index
    %c0_13 = arith.constant 0 : index
    %21 = vector.load %arg4[%c0_12, %c0_13] : memref<16x128xf32, #tpu.memory_space<vmem>>, vector<16x128xf32>
    %cst = arith.constant dense<0.000000e+00> : vector<16x128xf32>
    %22 = tpu.matmul %21, %19, %cst {dimension_numbers = #tpu.dot_dimension_numbers<[1], [1], [0], [0], [0, 0, 1, 0], [], []>} : vector<16x128xf32>, vector<128x128xf32>, vector<16x128xf32> -> vector<16x128xf32>
    %23 = arith.addf %20, %22 : vector<16x128xf32>
    %c0_14 = arith.constant 0 : index
    %c0_15 = arith.constant 0 : index
    %24 = vector.load %arg8[%c0_14, %c0_15] : memref<16x128xf32, #tpu.memory_space<vmem>>, vector<16x128xf32>
    tpu.vector_store %arg8[%c0_14, %c0_15], %23 {strides = array<i32>} : memref<16x128xf32, #tpu.memory_space<vmem>>, vector<16x128xf32>,
    %c0_i32_16 = arith.constant 0 : i32
    %25 = arith.cmpi eq, %arg1, %c0_i32_16 : i32
    %26 = arith.extui %25 : i1 to i32
    %c0_i32_17 = arith.constant 0 : i32
    %27 = arith.cmpi ne, %26, %c0_i32_17 : i32
    scf.if %27 {
      %c0_18 = arith.constant 0 : index
      %c0_19 = arith.constant 0 : index
      %28 = vector.load %arg8[%c0_18, %c0_19] : memref<16x128xf32, #tpu.memory_space<vmem>>, vector<16x128xf32>
      %c0_20 = arith.constant 0 : index
      %29 = memref.load %arg3[%c0_20] : memref<3xf32, #tpu.memory_space<smem>>
      %c0_21 = arith.constant 0 : index
      %c0_22 = arith.constant 0 : index
      %30 = vector.load %arg6[%c0_21, %c0_22] : memref<3x128xf32, #tpu.memory_space<vmem>>, vector<1x128xf32>
      %31 = vector.broadcast %29 : f32 to vector<1x128xf32>
      %32 = arith.mulf %31, %30 : vector<1x128xf32>
      %c1_23 = arith.constant 1 : index
      %33 = memref.load %arg3[%c1_23] : memref<3xf32, #tpu.memory_space<smem>>
      %c1_24 = arith.constant 1 : index
      %c0_25 = arith.constant 0 : index
      %34 = vector.load %arg6[%c1_24, %c0_25] : memref<3x128xf32, #tpu.memory_space<vmem>>, vector<1x128xf32>
      %35 = vector.broadcast %33 : f32 to vector<1x128xf32>
      %36 = arith.mulf %35, %34 : vector<1x128xf32>
      %37 = arith.addf %32, %36 : vector<1x128xf32>
      %c2_26 = arith.constant 2 : index
      %38 = memref.load %arg3[%c2_26] : memref<3xf32, #tpu.memory_space<smem>>
      %c2_27 = arith.constant 2 : index
      %c0_28 = arith.constant 0 : index
      %39 = vector.load %arg6[%c2_27, %c0_28] : memref<3x128xf32, #tpu.memory_space<vmem>>, vector<1x128xf32>
      %40 = vector.broadcast %38 : f32 to vector<1x128xf32>
      %41 = arith.mulf %40, %39 : vector<1x128xf32>
      %42 = arith.addf %37, %41 : vector<1x128xf32>
      %43 = vector.broadcast %42 : vector<1x128xf32> to vector<16x128xf32>
      %44 = arith.addf %28, %43 : vector<16x128xf32>
      %c0_29 = arith.constant 0 : index
      %c0_30 = arith.constant 0 : index
      %45 = vector.load %arg7[%c0_29, %c0_30] : memref<16x128xf32, #tpu.memory_space<vmem>>, vector<16x128xf32>
      tpu.vector_store %arg7[%c0_29, %c0_30], %44 {strides = array<i32>} : memref<16x128xf32, #tpu.memory_space<vmem>>, vector<16x128xf32>,
    } else {
    }
    return
  }
  func.func @transform_0(%arg0: i32, %arg1: i32) -> i32 {
    %c0_i32 = arith.constant 0 : i32
    %c0_i32_0 = arith.constant 0 : i32
    return %c0_i32 : i32
  }
  func.func @transform_1(%arg0: i32, %arg1: i32) -> i32 {
    %c0_i32 = arith.constant 0 : i32
    %c0_i32_0 = arith.constant 0 : i32
    return %c0_i32 : i32
  }
  func.func @transform_2(%arg0: i32, %arg1: i32) -> (i32, i32) {
    %c0_i32 = arith.constant 0 : i32
    %c0_i32_0 = arith.constant 0 : i32
    return %c0_i32, %arg1 : i32, i32
  }
  func.func @transform_3(%arg0: i32, %arg1: i32) -> (i32, i32, i32) {
    %c0_i32 = arith.constant 0 : i32
    %c0_i32_0 = arith.constant 0 : i32
    return %c0_i32, %arg0, %arg1 : i32, i32, i32
  }
  func.func @transform_4(%arg0: i32, %arg1: i32) -> (i32, i32) {
    %c0_i32 = arith.constant 0 : i32
    %c0_i32_0 = arith.constant 0 : i32
    return %c0_i32, %arg0 : i32, i32
  }
  func.func @transform_5(%arg0: i32, %arg1: i32) -> (i32, i32) {
    %c0_i32 = arith.constant 0 : i32
    %c0_i32_0 = arith.constant 0 : i32
    return %c0_i32, %arg0 : i32, i32
  }
}

</mosaic_0001>

<llo_original>
// kernel: tpu_custom_call.1
$region0: #{tpu_custom_call.1}
  #allocation0 [shape = 'u32[]', space=smem, size = 0x4, offset = 0x4, fixed_abs, tag = 'smem constant byte address 0x4 - core index']
  #allocation1 [shape = 'u32[144,128]{1,0:T(1,128)}', space=vmem, size = 0x12000, scoped, tag = 'internal scratch']
  #allocation2 [shape = 'f32[16,128]{1,0:T(8,128)}', space=vmem, size = 0x2000, scoped, tag = 'scratch operand']
  %s0 = inlined_call_operand.hbm [shape: f32[3], index: 0, kind: input, shape index: {}]
  %s1 = inlined_call_operand.vmem [shape: f32[3], index: 1, kind: input, shape index: {}]
  %s2 = inlined_call_operand.hbm [shape: f32[16,128], index: 2, kind: input, shape index: {}]
  %s3 = inlined_call_operand.hbm [shape: f32[3,128,128], index: 3, kind: input, shape index: {}]
  %s4 = inlined_call_operand.vmem [shape: f32[3,128], index: 4, kind: input, shape index: {}]
  %s5 = inlined_call_operand.hbm [shape: f32[16,128], index: 5, kind: output, shape index: {}]
  %s6 = sld [smem:[#allocation0]]
  $region54: #{tpu_custom_call.1} parent=0
    _
  %s8 = ssub.s32 1, %s6
  %s9 = scalar_select 0, %s8, %s6
  $region1: #{tpu_custom_call.1} parent=0
    #allocation3 [shape = 'u8[512]{0}', space=smem, size = 0x200, scoped, tag = 'input window, operand 0, single buffered']
    #allocation4 [shape = 's32[1]{0}', space=sflag, size = 0x4, scoped, tag = 'scoped memory for tpu_custom_call.1']
    #allocation5 [shape = 's32[1]{0}', space=sflag, size = 0x4, scoped, tag = 'scoped memory for tpu_custom_call.1']
    #allocation6 [shape = 's32[1]{0}', space=sflag, size = 0x4, scoped, tag = 'scoped memory for tpu_custom_call.1']
    #allocation7 [shape = 's32[1]{0}', space=sflag, size = 0x4, scoped, tag = 'scoped memory for tpu_custom_call.1']
    #allocation8 [shape = 'u8[512]{0}', space=smem, size = 0x200, scoped, tag = 'input window, operand 1, single buffered']
    #allocation9 [shape = 'u8[8192]{0}', space=vmem, size = 0x2000, scoped, tag = 'input window, operand 2, single buffered']
    #allocation10 [shape = 'u8[196608]{0}', space=vmem, size = 0x30000, scoped, tag = 'input window, operand 3, single buffered']
    #allocation11 [shape = 's32[1]{0}', space=sflag, size = 0x4, scoped, tag = 'scoped memory for tpu_custom_call.1']
    #allocation12 [shape = 'u8[8192]{0}', space=vmem, size = 0x2000, scoped, tag = 'output window, operand 0, single buffered']
    %10 = vsyncpa [#allocation6], 0
    %11 = vsyncpa [#allocation7], 0
    %12 = vsyncpa [#allocation4], 0
    %13 = vsyncpa [#allocation11], 0
    %14 = vsyncpa [#allocation5], 0
    // Predicated region
    $region2: #{tpu_custom_call.1} parent=1 // pred_check
      _
    $region3: #{tpu_custom_call.1} parent=1 // pred_check_branch
      %16 = sbr.rel (0) target = $region5
    $region4: #{tpu_custom_call.1} parent=1 // pred_region
      %s18 = ssub.s32 16, 16
      %19 = vsyncadd [#allocation6], %s18
      %22 = dma.hbm_to_smem %s0, 16, [#allocation3], [#allocation6]
    $region5: #{tpu_custom_call.1} parent=1 // pred_fallthru
      _
    // Predicated region
    $region6: #{tpu_custom_call.1} parent=1 // pred_check
      _
    $region7: #{tpu_custom_call.1} parent=1 // pred_check_branch
      %24 = sbr.rel (0) target = $region9
    $region8: #{tpu_custom_call.1} parent=1 // pred_region
      %s26 = ssub.s32 16, 16
      %27 = vsyncadd [#allocation7], %s26
      %s29 = sshll.u32 %s1, 4
      %s30 = int_to_ptr.vmem [resolvable:$true] %s29
      %32 = dma.vmem_to_smem %s30, 16, [#allocation8], [#allocation7]
    $region9: #{tpu_custom_call.1} parent=1 // pred_fallthru
      _
    // Predicated region
    $region10: #{tpu_custom_call.1} parent=1 // pred_check
      _
    $region11: #{tpu_custom_call.1} parent=1 // pred_check_branch
      %34 = sbr.rel (0) target = $region13
    $region12: #{tpu_custom_call.1} parent=1 // pred_region
      %s36 = ssub.s32 256, 256
      %37 = vsyncadd [#allocation4], %s36
      %s38 = sshll.u32 [#allocation9], 4
      %s39 = int_to_ptr.vmem [resolvable:$true] %s38
      %44 = dma.hbm_to_vmem [thread:$0]  %s2, 256, %s39, [#allocation4], 128, 128, 8
    $region13: #{tpu_custom_call.1} parent=1 // pred_fallthru
      _
    // Predicated region
    $region14: #{tpu_custom_call.1} parent=1 // pred_check
      _
    $region15: #{tpu_custom_call.1} parent=1 // pred_check_branch
      %46 = sbr.rel (0) target = $region17
    $region16: #{tpu_custom_call.1} parent=1 // pred_region
      %s48 = ssub.s32 6144, 6144
      %49 = vsyncadd [#allocation11], %s48
      %s50 = sshll.u32 [#allocation10], 4
      %s51 = int_to_ptr.vmem [resolvable:$true] %s50
      %56 = dma.hbm_to_vmem [thread:$0]  %s3, 6144, %s51, [#allocation11], 128, 128, 8
    $region17: #{tpu_custom_call.1} parent=1 // pred_fallthru
      _
    // Predicated region
    $region18: #{tpu_custom_call.1} parent=1 // pred_check
      _
    $region19: #{tpu_custom_call.1} parent=1 // pred_check_branch
      %58 = sbr.rel (0) target = $region21
    $region20: #{tpu_custom_call.1} parent=1 // pred_region
      _
    $region21: #{tpu_custom_call.1} parent=1 // pred_fallthru
      _
    // Predicated region
    $region22: #{tpu_custom_call.1} parent=1 // pred_check
      _
    $region23: #{tpu_custom_call.1} parent=1 // pred_check_branch
      %60 = sbr.rel (0) target = $region25
    $region24: #{tpu_custom_call.1} parent=1 // pred_region
      %61 = dma.done [#allocation6], 16
    $region25: #{tpu_custom_call.1} parent=1 // pred_fallthru
      _
    // Predicated region
    $region26: #{tpu_custom_call.1} parent=1 // pred_check
      _
    $region27: #{tpu_custom_call.1} parent=1 // pred_check_branch
      %63 = sbr.rel (0) target = $region29
    $region28: #{tpu_custom_call.1} parent=1 // pred_region
      %64 = dma.done [#allocation7], 16
    $region29: #{tpu_custom_call.1} parent=1 // pred_fallthru
      _
    // Predicated region
    $region30: #{tpu_custom_call.1} parent=1 // pred_check
      _
    $region31: #{tpu_custom_call.1} parent=1 // pred_check_branch
      %66 = sbr.rel (0) target = $region33
    $region32: #{tpu_custom_call.1} parent=1 // pred_region
      %67 = dma.done [#allocation4], 256
    $region33: #{tpu_custom_call.1} parent=1 // pred_fallthru
      _
    // Predicated region
    $region34: #{tpu_custom_call.1} parent=1 // pred_check
      _
    $region35: #{tpu_custom_call.1} parent=1 // pred_check_branch
      %69 = sbr.rel (0) target = $region37
    $region36: #{tpu_custom_call.1} parent=1 // pred_region
      %70 = dma.done [#allocation11], 6144
    $region37: #{tpu_custom_call.1} parent=1 // pred_fallthru
      _
    %71 = sfence
    %p72 = scmp.eq.s32.totalorder 0, 0
    // Predicated region
    $region38: #{tpu_custom_call.1} parent=1 // pred_check
      %p73 = pneg %p72
    $region39: #{tpu_custom_call.1} parent=1 // pred_check_branch
      %75 = sbr.rel (%p73) target = $region41
    $region40: #{tpu_custom_call.1} parent=1 // pred_region
      %76 = vst [vmem:[#allocation2] sm:$0xff] 0.0
      %77 = vst [vmem:[#allocation2 + $0x8] sm:$0xff] 0.0
    $region41: #{tpu_custom_call.1} parent=1 // pred_fallthru
      _
    %s78 = sld [smem:[#allocation3]]
    %v79 = vld [vmem:[#allocation10] sm:$0xff]
    %v80 = vld [vmem:[#allocation10 + $0x8] sm:$0xff]
    %v81 = vld [vmem:[#allocation10 + $0x10] sm:$0xff]
    %v82 = vld [vmem:[#allocation10 + $0x18] sm:$0xff]
    %v83 = vld [vmem:[#allocation10 + $0x20] sm:$0xff]
    %v84 = vld [vmem:[#allocation10 + $0x28] sm:$0xff]
    %v85 = vld [vmem:[#allocation10 + $0x30] sm:$0xff]
    %v86 = vld [vmem:[#allocation10 + $0x38] sm:$0xff]
    %v87 = vld [vmem:[#allocation10 + $0x40] sm:$0xff]
    %v88 = vld [vmem:[#allocation10 + $0x48] sm:$0xff]
    %v89 = vld [vmem:[#allocation10 + $0x50] sm:$0xff]
    %v90 = vld [vmem:[#allocation10 + $0x58] sm:$0xff]
    %v91 = vld [vmem:[#allocation10 + $0x60] sm:$0xff]
    %v92 = vld [vmem:[#allocation10 + $0x68] sm:$0xff]
    %v93 = vld [vmem:[#allocation10 + $0x70] sm:$0xff]
    %v94 = vld [vmem:[#allocation10 + $0x78] sm:$0xff]
    %v95 = vstv %s78
    %v96 = vmul.f32 %v95, %v79
    %v97 = vmul.f32 %v95, %v80
    %v98 = vmul.f32 %v95, %v81
    %v99 = vmul.f32 %v95, %v82
    %v100 = vmul.f32 %v95, %v83
    %v101 = vmul.f32 %v95, %v84
    %v102 = vmul.f32 %v95, %v85
    %v103 = vmul.f32 %v95, %v86
    %v104 = vmul.f32 %v95, %v87
    %v105 = vmul.f32 %v95, %v88
    %v106 = vmul.f32 %v95, %v89
    %v107 = vmul.f32 %v95, %v90
    %v108 = vmul.f32 %v95, %v91
    %v109 = vmul.f32 %v95, %v92
    %v110 = vmul.f32 %v95, %v93
    %v111 = vmul.f32 %v95, %v94
    %s112 = sld [smem:[#allocation3 + $0x1]]
    %s113 = scalar_lea.vmem [#allocation10], 128
    %v114 = vld [vmem:[%s113] sm:$0xff]
    %v115 = vld [vmem:[%s113 + $0x8] sm:$0xff]
    %v116 = vld [vmem:[%s113 + $0x10] sm:$0xff]
    %v117 = vld [vmem:[%s113 + $0x18] sm:$0xff]
    %v118 = vld [vmem:[%s113 + $0x20] sm:$0xff]
    %v119 = vld [vmem:[%s113 + $0x28] sm:$0xff]
    %v120 = vld [vmem:[%s113 + $0x30] sm:$0xff]
    %v121 = vld [vmem:[%s113 + $0x38] sm:$0xff]
    %v122 = vld [vmem:[%s113 + $0x40] sm:$0xff]
    %v123 = vld [vmem:[%s113 + $0x48] sm:$0xff]
    %v124 = vld [vmem:[%s113 + $0x50] sm:$0xff]
    %v125 = vld [vmem:[%s113 + $0x58] sm:$0xff]
    %v126 = vld [vmem:[%s113 + $0x60] sm:$0xff]
    %v127 = vld [vmem:[%s113 + $0x68] sm:$0xff]
    %v128 = vld [vmem:[%s113 + $0x70] sm:$0xff]
    %v129 = vld [vmem:[%s113 + $0x78] sm:$0xff]
    %v130 = vstv %s112
    %v131 = vmul.f32 %v130, %v114
    %v132 = vmul.f32 %v130, %v115
    %v133 = vmul.f32 %v130, %v116
    %v134 = vmul.f32 %v130, %v117
    %v135 = vmul.f32 %v130, %v118
    %v136 = vmul.f32 %v130, %v119
    %v137 = vmul.f32 %v130, %v120
    %v138 = vmul.f32 %v130, %v121
    %v139 = vmul.f32 %v130, %v122
    %v140 = vmul.f32 %v130, %v123
    %v141 = vmul.f32 %v130, %v124
    %v142 = vmul.f32 %v130, %v125
    %v143 = vmul.f32 %v130, %v126
    %v144 = vmul.f32 %v130, %v127
    %v145 = vmul.f32 %v130, %v128
    %v146 = vmul.f32 %v130, %v129
    %v147 = vadd.f32 %v96, %v131
    %v148 = vadd.f32 %v97, %v132
    %v149 = vadd.f32 %v98, %v133
    %v150 = vadd.f32 %v99, %v134
    %v151 = vadd.f32 %v100, %v135
    %v152 = vadd.f32 %v101, %v136
    %v153 = vadd.f32 %v102, %v137
    %v154 = vadd.f32 %v103, %v138
    %v155 = vadd.f32 %v104, %v139
    %v156 = vadd.f32 %v105, %v140
    %v157 = vadd.f32 %v106, %v141
    %v158 = vadd.f32 %v107, %v142
    %v159 = vadd.f32 %v108, %v143
    %v160 = vadd.f32 %v109, %v144
    %v161 = vadd.f32 %v110, %v145
    %v162 = vadd.f32 %v111, %v146
    %s163 = sld [smem:[#allocation3 + $0x2]]
    %s164 = scalar_lea.vmem [#allocation10], 256
    %v165 = vld [vmem:[%s164] sm:$0xff]
    %v166 = vld [vmem:[%s164 + $0x8] sm:$0xff]
    %v167 = vld [vmem:[%s164 + $0x10] sm:$0xff]
    %v168 = vld [vmem:[%s164 + $0x18] sm:$0xff]
    %v169 = vld [vmem:[%s164 + $0x20] sm:$0xff]
    %v170 = vld [vmem:[%s164 + $0x28] sm:$0xff]
    %v171 = vld [vmem:[%s164 + $0x30] sm:$0xff]
    %v172 = vld [vmem:[%s164 + $0x38] sm:$0xff]
    %v173 = vld [vmem:[%s164 + $0x40] sm:$0xff]
    %v174 = vld [vmem:[%s164 + $0x48] sm:$0xff]
    %v175 = vld [vmem:[%s164 + $0x50] sm:$0xff]
    %v176 = vld [vmem:[%s164 + $0x58] sm:$0xff]
    %v177 = vld [vmem:[%s164 + $0x60] sm:$0xff]
    %v178 = vld [vmem:[%s164 + $0x68] sm:$0xff]
    %v179 = vld [vmem:[%s164 + $0x70] sm:$0xff]
    %v180 = vld [vmem:[%s164 + $0x78] sm:$0xff]
    %v181 = vstv %s163
    %v182 = vmul.f32 %v181, %v165
    %v183 = vmul.f32 %v181, %v166
    %v184 = vmul.f32 %v181, %v167
    %v185 = vmul.f32 %v181, %v168
    %v186 = vmul.f32 %v181, %v169
    %v187 = vmul.f32 %v181, %v170
    %v188 = vmul.f32 %v181, %v171
    %v189 = vmul.f32 %v181, %v172
    %v190 = vmul.f32 %v181, %v173
    %v191 = vmul.f32 %v181, %v174
    %v192 = vmul.f32 %v181, %v175
    %v193 = vmul.f32 %v181, %v176
    %v194 = vmul.f32 %v181, %v177
    %v195 = vmul.f32 %v181, %v178
    %v196 = vmul.f32 %v181, %v179
    %v197 = vmul.f32 %v181, %v180
    %v198 = vadd.f32 %v147, %v182
    %v199 = vadd.f32 %v148, %v183
    %v200 = vadd.f32 %v149, %v184
    %v201 = vadd.f32 %v150, %v185
    %v202 = vadd.f32 %v151, %v186
    %v203 = vadd.f32 %v152, %v187
    %v204 = vadd.f32 %v153, %v188
    %v205 = vadd.f32 %v154, %v189
    %v206 = vadd.f32 %v155, %v190
    %v207 = vadd.f32 %v156, %v191
    %v208 = vadd.f32 %v157, %v192
    %v209 = vadd.f32 %v158, %v193
    %v210 = vadd.f32 %v159, %v194
    %v211 = vadd.f32 %v160, %v195
    %v212 = vadd.f32 %v161, %v196
    %v213 = vadd.f32 %v162, %v197
    %v214 = vld [vmem:[#allocation2] sm:$0xff]
    %v215 = vld [vmem:[#allocation2 + $0x8] sm:$0xff]
    %v216 = vld [vmem:[#allocation9] sm:$0xff]
    %v217 = vld [vmem:[#allocation9 + $0x8] sm:$0xff]
    %218 = vmatprep.subr.mxu0 0.0
    %219 = vmatpush1.xpose.msra.mxu0 %v198
    %220 = vmatprep.subr.mxu0 0.0
    %221 = vmatpush1.xpose.msra.mxu0 %v199
    %222 = vmatprep.subr.mxu0 0.0
    %223 = vmatpush1.xpose.msra.mxu0 %v200
    %224 = vmatprep.subr.mxu0 0.0
    %225 = vmatpush1.xpose.msra.mxu0 %v201
    %226 = vmatprep.subr.mxu0 0.0
    %227 = vmatpush1.xpose.msra.mxu0 %v202
    %228 = vmatprep.subr.mxu0 0.0
    %229 = vmatpush1.xpose.msra.mxu0 %v203
    %230 = vmatprep.subr.mxu0 0.0
    %231 = vmatpush1.xpose.msra.mxu0 %v204
    %232 = vmatprep.subr.mxu0 0.0
    %233 = vmatpush1.xpose.msra.mxu0 %v205
    %234 = vmatprep.subr.mxu0 0.0
    %235 = vmatpush1.xpose.msra.mxu0 %v206
    %236 = vmatprep.subr.mxu0 0.0
    %237 = vmatpush1.xpose.msra.mxu0 %v207
    %238 = vmatprep.subr.mxu0 0.0
    %239 = vmatpush1.xpose.msra.mxu0 %v208
    %240 = vmatprep.subr.mxu0 0.0
    %241 = vmatpush1.xpose.msra.mxu0 %v209
    %242 = vmatprep.subr.mxu0 0.0
    %243 = vmatpush1.xpose.msra.mxu0 %v210
    %244 = vmatprep.subr.mxu0 0.0
    %245 = vmatpush1.xpose.msra.mxu0 %v211
    %246 = vmatprep.subr.mxu0 0.0
    %247 = vmatpush1.xpose.msra.mxu0 %v212
    %248 = vmatprep.subr.mxu0 0.0
    %249 = vmatpush1.xpose.msra.mxu0 %v213
    %250 = vmatprep.subr.mxu0 0.0
    %251 = vmatpush1.xpose.msra.mxu0 0.0
    %252 = vmatprep.subr.mxu0 0.0
    %253 = vmatpush1.xpose.msra.mxu0 0.0
    %254 = vmatprep.subr.mxu0 0.0
    %255 = vmatpush1.xpose.msra.mxu0 0.0
    %256 = vmatprep.subr.mxu0 0.0
    %257 = vmatpush1.xpose.msra.mxu0 0.0
    %258 = vmatprep.subr.mxu0 0.0
    %259 = vmatpush1.xpose.msra.mxu0 0.0
    %260 = vmatprep.subr.mxu0 0.0
    %261 = vmatpush1.xpose.msra.mxu0 0.0
    %262 = vmatprep.subr.mxu0 0.0
    %263 = vmatpush1.xpose.msra.mxu0 0.0
    %264 = vmatprep.subr.mxu0 0.0
    %265 = vmatpush1.xpose.msra.mxu0 0.0
    %266 = vmatprep.subr.mxu0 0.0
    %267 = vmatpush1.xpose.msra.mxu0 0.0
    %268 = vmatprep.subr.mxu0 0.0
    %269 = vmatpush1.xpose.msra.mxu0 0.0
    %270 = vmatprep.subr.mxu0 0.0
    %271 = vmatpush1.xpose.msra.mxu0 0.0
    %272 = vmatprep.subr.mxu0 0.0
    %273 = vmatpush1.xpose.msra.mxu0 0.0
    %274 = vmatprep.subr.mxu0 0.0
    %275 = vmatpush1.xpose.msra.mxu0 0.0
    %276 = vmatprep.subr.mxu0 0.0
    %277 = vmatpush1.xpose.msra.mxu0 0.0
    %278 = vmatprep.subr.mxu0 0.0
    %279 = vmatpush1.xpose.msra.mxu0 0.0
    %280 = vmatprep.subr.mxu0 0.0
    %281 = vmatpush1.xpose.msra.mxu0 0.0
    %282 = vmatprep.mubr.f32.mxu0 0.0
    %283 = vmatmul.mubr.f32.gmra.mrb[0].mxu0 %v216
    %v284 = vpop.f32.mrb[0].mxu0
    %v285 = vadd.f32 0.0, %v284
    %v286 = vpop.f32.mrb[0].mxu0
    %287 = vmatprep.mubr.f32.mxu0 0.0
    %288 = vmatmul.mubr.f32.gmra.mrb[0].mxu0 %v217
    %v289 = vpop.f32.mrb[0].mxu0
    %v290 = vadd.f32 0.0, %v289
    %v291 = vpop.f32.mrb[0].mxu0
    %292 = vdwg.mxu0
    %v293 = vadd.f32 %v214, %v285
    %v294 = vadd.f32 %v215, %v290
    %295 = vst [vmem:[#allocation2] sm:$0xff] %v293
    %296 = vst [vmem:[#allocation2 + $0x8] sm:$0xff] %v294
    // Predicated region
    $region42: #{tpu_custom_call.1} parent=1 // pred_check
      %p297 = pneg %p72
    $region43: #{tpu_custom_call.1} parent=1 // pred_check_branch
      %299 = sbr.rel (%p297) target = $region45
    $region44: #{tpu_custom_call.1} parent=1 // pred_region
      %v300 = vld [vmem:[#allocation2] sm:$0xff]
      %v301 = vld [vmem:[#allocation2 + $0x8] sm:$0xff]
      %s302 = sld [smem:[#allocation8]]
      %v303 = vld [vmem:[%s4] sm:$0x1]
      %v304 = vstv %s302
      %v305 = vmul.f32 %v304, %v303
      %s306 = sld [smem:[#allocation8 + $0x1]]
      %v307 = vld [vmem:[%s4 + $0x1] sm:$0x1]
      %v308 = vstv %s306
      %v309 = vmul.f32 %v308, %v307
      %v310 = vadd.f32 %v305, %v309
      %s311 = sld [smem:[#allocation8 + $0x2]]
      %v312 = vld [vmem:[%s4 + $0x2] sm:$0x1]
      %v313 = vstv %s311
      %v314 = vmul.f32 %v313, %v312
      %v315 = vadd.f32 %v310, %v314
      %v316 = vlaneseq
      %v317 = vshrl.u32 %v316, 7
      %v318 = vsub.s32 0, %v317
      %v319 = vrot.slane %v315, %v318
      %v320 = vadd.f32 %v300, %v319
      %v321 = vadd.f32 %v301, %v319
      %322 = vst [vmem:[#allocation12] sm:$0xff] %v320
      %323 = vst [vmem:[#allocation12 + $0x8] sm:$0xff] %v321
    $region45: #{tpu_custom_call.1} parent=1 // pred_fallthru
      _
    // Predicated region
    $region46: #{tpu_custom_call.1} parent=1 // pred_check
      _
    $region47: #{tpu_custom_call.1} parent=1 // pred_check_branch
      %325 = sbr.rel (0) target = $region49
    $region48: #{tpu_custom_call.1} parent=1 // pred_region
      %s327 = ssub.s32 256, 256
      %328 = vsyncadd [#allocation5], %s327
      %s329 = sshll.u32 [#allocation12], 4
      %s330 = int_to_ptr.vmem [resolvable:$true] %s329
      %335 = dma.vmem_to_hbm [thread:$0]  %s330, 256, %s5, [#allocation5], 128, 128, 8
    $region49: #{tpu_custom_call.1} parent=1 // pred_fallthru
      _
    // Predicated region
    $region50: #{tpu_custom_call.1} parent=1 // pred_check
      _
    $region51: #{tpu_custom_call.1} parent=1 // pred_check_branch
      %337 = sbr.rel (0) target = $region53
    $region52: #{tpu_custom_call.1} parent=1 // pred_region
      %338 = dma.done [#allocation5], 256
    $region53: #{tpu_custom_call.1} parent=1 // pred_fallthru
      _
    %339 = vsyncpa [#allocation4], 1
    %340 = vsyncpa [#allocation11], 1
    %341 = vsyncpa [#allocation5], 1
    %342 = vsyncpa [#allocation6], 1
    %343 = vsyncpa [#allocation7], 1

</llo_original>
